<compile_context>
chip_gen: v6e
topology: v6e:2x2x1
jax: 0.10.0
libtpu: 0.0.40
codegen_flags: <defaults>
</compile_context>

<pallas_src>
import functools

import jax
import jax.numpy as jnp
from jax.experimental import pallas as pl
from jax.experimental.pallas import tpu as pltpu

_MIN_VMEM = 32 * 1024 * 1024
_MAX_VMEM = 64 * 1024 * 1024   # v7x physical VMEM per TC


def _round_up(x: int, m: int) -> int:
    return -(-x // m) * m


def _dft_matrix_c(n: int, sign: float, scale: float, centered: bool):
    """Complex DFT matrix scale * exp(sign*2*pi*i*j*k/n).

    If centered, the ifftshift(input)/fftshift(output) permutations are folded
    in as a symmetric row/column permutation (valid for even and odd n)."""
    k = jnp.arange(n, dtype=jnp.float32)
    ang = (sign * 2.0 * jnp.pi / float(n)) * jnp.outer(k, k)
    w = (scale * (jnp.cos(ang) + 1j * jnp.sin(ang))).astype(jnp.complex64)
    if centered:
        p = jnp.fft.fftshift(jnp.arange(n))
        w = w[p][:, p]
    return w


def _blockify(w):
    """Real 2x2 block form for right-multiplication:
       [Yr | Yi] = [Xr | Xi] @ [[Wr, Wi], [-Wi, Wr]]  ==  (Xr+iXi)(Wr+iWi)."""
    wr = jnp.real(w).astype(jnp.float32)
    wi = jnp.imag(w).astype(jnp.float32)
    return jnp.block([[wr, wi], [-wi, wr]])


# --------------------------------------------------------------------------
# Kernels
# --------------------------------------------------------------------------
def _kron_kernel(x_ref, b_ref, o_ref):
    """Small-plane path: one fused block-real matmul per batch tile.

    x_ref: (Bt, 2*H*W) = [Xr | Xi] flattened planes
    b_ref: (2*H*W, 2*H*W) block form of W_H (x) W_W
    """
    o_ref[...] = jnp.dot(x_ref[...], b_ref[...],
                         preferred_element_type=jnp.float32)


def _sep_kernel(x_ref, bw_ref, bh_ref, o_ref):
    """Separable 2-D DFT on a tile of Bt planes: two fused block-real matmuls.

    x_ref: (Bt, H, 2W) = [Xr | Xi] along the last dim
    bw_ref: (2W, 2W) block matrix for the W-dim transform
    bh_ref: (2H, 2H) block matrix for the H-dim transform (W_H is symmetric,
            so the H transform is a right-multiply on transposed planes).
    """
    bt, h, w2 = x_ref.shape
    w = w2 // 2
    h2 = bh_ref.shape[0]
    # stage 1: transform along W (rows are independent -> flatten batch*H)
    x = x_ref[...].reshape(bt * h, w2)
    t = jnp.dot(x, bw_ref[...],
                preferred_element_type=jnp.float32).reshape(bt, h, w2)
    # repack planes as (Bt, W, 2H) = [Tr^T | Ti^T]
    tr = jnp.swapaxes(t[:, :, :w], 1, 2)
    ti = jnp.swapaxes(t[:, :, w:], 1, 2)
    t2 = jnp.concatenate([tr, ti], axis=-1).reshape(bt * w, h2)
    # stage 2: transform along H
    y = jnp.dot(t2, bh_ref[...],
                preferred_element_type=jnp.float32).reshape(bt, w, h2)
    yr = jnp.swapaxes(y[:, :, :h], 1, 2)
    yi = jnp.swapaxes(y[:, :, h:], 1, 2)
    o_ref[...] = jnp.concatenate([yr, yi], axis=-1)


# --------------------------------------------------------------------------
# Wrappers around pallas_call
# --------------------------------------------------------------------------
def _fft2_kron(xr, xi, wh, ww):
    """Small planes: full 2-D DFT as one lane-dense Kronecker matmul."""
    bc, hw = xr.shape
    n2 = 2 * hw

    m = jnp.kron(wh, ww)                       # (H*W, H*W) complex
    bmat = _blockify(m)                        # (2*H*W, 2*H*W) f32
    xblk = jnp.concatenate([xr, xi], axis=-1)  # (bc, 2*H*W)

    # Batch tile: multiple of 8 (sublane constraint); >=2 grid steps when the
    # batch is large enough so the "parallel" axis can feed both v7x cores.
    bt = min(128, bc if bc <= 8 else -(-bc // 2))
    bt = _round_up(max(bt, 1), 8)
    grid_b = -(-bc // bt)
    bcp = grid_b * bt
    if bcp != bc:
        xblk = jnp.pad(xblk, ((0, bcp - bc), (0, 0)))

    est = 4 * bt * n2 * 4 + 2 * n2 * n2 * 4    # in/out double-buffered + B
    vlim = int(min(max(2 * est, _MIN_VMEM), _MAX_VMEM))

    y = pl.pallas_call(
        _kron_kernel,
        out_shape=jax.ShapeDtypeStruct((bcp, n2), jnp.float32),
        grid_spec=pltpu.PrefetchScalarGridSpec(
            num_scalar_prefetch=0,
            grid=(grid_b,),
            in_specs=[
                pl.BlockSpec((bt, n2), lambda b: (b, 0)),   # [Xr|Xi] planes
                pl.BlockSpec((n2, n2), lambda b: (0, 0)),   # block DFT matrix
            ],
            out_specs=pl.BlockSpec((bt, n2), lambda b: (b, 0)),
        ),
        compiler_params=pltpu.CompilerParams(
            dimension_semantics=("parallel",),
            vmem_limit_bytes=vlim),
    )(xblk, bmat)

    y = y[:bc]
    return y[:, :hw], y[:, hw:]


def _fft2_sep(xr, xi, wh, ww):
    """Larger planes: separable batched block-real DFT (two matmuls/tile)."""
    bc, H, W = xr.shape
    bw = _blockify(ww)                          # (2W, 2W)
    bh = _blockify(wh)                          # (2H, 2H)
    xblk = jnp.concatenate([xr, xi], axis=-1)   # (bc, H, 2W)

    plane_bytes = H * 2 * W * 4
    bt = max(1, min(bc, (2 * 1024 * 1024) // max(plane_bytes, 1)))
    if bt == bc and bc >= 2:
        bt = -(-bc // 2)                        # keep >=2 grid steps (v7x)
    grid_b = -(-bc // bt)
    bcp = grid_b * bt
    if bcp != bc:
        xblk = jnp.pad(xblk, ((0, bcp - bc), (0, 0), (0, 0)))

    est = 8 * bt * plane_bytes + 2 * (bw.size + bh.size) * 4
    vlim = int(min(max(2 * est, _MIN_VMEM), _MAX_VMEM))

    y = pl.pallas_call(
        _sep_kernel,
        out_shape=jax.ShapeDtypeStruct((bcp, H, 2 * W), jnp.float32),
        grid_spec=pltpu.PrefetchScalarGridSpec(
            num_scalar_prefetch=0,
            grid=(grid_b,),
            in_specs=[
                pl.BlockSpec((bt, H, 2 * W), lambda b: (b, 0, 0)),
                pl.BlockSpec((2 * W, 2 * W), lambda b: (0, 0)),
                pl.BlockSpec((2 * H, 2 * H), lambda b: (0, 0)),
            ],
            out_specs=pl.BlockSpec((bt, H, 2 * W), lambda b: (b, 0, 0)),
        ),
        compiler_params=pltpu.CompilerParams(
            dimension_semantics=("parallel",),
            vmem_limit_bytes=vlim),
    )(xblk, bw, bh)

    y = y[:bc]
    return y[..., :W], y[..., W:]


@functools.partial(jax.jit, static_argnames=("adjoint", "centered", "norm"))
def fft_module(data, adjoint: bool = False, centered: bool = False,
               norm: str = "ortho"):
    """Pallas equivalent of FFT(ndims=2, norm=...).forward(data, adjoint, centered)."""
    assert jnp.iscomplexobj(data)
    # TODO(synk): only ndims=2 (fft_dims = [-1, -2]) is implemented.
    *lead, H, W = data.shape
    bc = 1
    for d in lead:
        bc *= d

    sign = 1.0 if adjoint else -1.0
    if norm == "ortho":
        sh, sw = 1.0 / (H ** 0.5), 1.0 / (W ** 0.5)
    else:  # norm=None semantics: forward unscaled, inverse 1/N per dim
        sh, sw = ((1.0 / H, 1.0 / W) if adjoint else (1.0, 1.0))

    # centered shifts are folded into the DFT matrices (no extra data passes).
    wh = _dft_matrix_c(H, sign, sh, centered)
    ww = _dft_matrix_c(W, sign, sw, centered)

    # TODO(synk): real/imag split + recombine are wrapper-side XLA passes; a
    # complex64->f32 bitcast view would remove them entirely.
    xr = jnp.real(data).astype(jnp.float32)
    xi = jnp.imag(data).astype(jnp.float32)

    if H * W <= 512:
        yr, yi = _fft2_kron(xr.reshape(bc, H * W), xi.reshape(bc, H * W), wh, ww)
    else:
        # TODO(synk): for very large H/W a four-step (Cooley-Tukey) split would
        # cut FLOPs ~sqrt(N)x; dense separable DFT is used here.
        yr, yi = _fft2_sep(xr.reshape(bc, H, W), xi.reshape(bc, H, W), wh, ww)

    yr = yr.reshape(*lead, H, W)
    yi = yi.reshape(*lead, H, W)
    return (yr + 1j * yi).astype(jnp.complex64)


if __name__ == "__main__":
    key = jax.random.PRNGKey(0)
    kr, ki = jax.random.split(key)
    B, C, H, W = 2, 4, 16, 16
    x = (jax.random.normal(kr, (B, C, H, W), dtype=jnp.float32)
         + 1j * jax.random.normal(ki, (B, C, H, W), dtype=jnp.float32)
         ).astype(jnp.complex64)

    tol = 1e-2

    # Default forward path of the PyTorch module: fftn, norm='ortho'.
    y = jax.block_until_ready(fft_module(x, adjoint=False, centered=False))
    y_ref = jnp.fft.fftn(x, axes=(-2, -1), norm="ortho")
    err = float(jnp.max(jnp.abs(y - y_ref)))
    assert err < tol, f"forward max abs error too large: {err}"

    # Adjoint (ifft) path.
    z = jax.block_until_ready(fft_module(x, adjoint=True, centered=False))
    z_ref = jnp.fft.ifftn(x, axes=(-2, -1), norm="ortho")
    errz = float(jnp.max(jnp.abs(z - z_ref)))
    assert errz < tol, f"adjoint max abs error too large: {errz}"

    # Centered forward (shifts folded into the DFT matrices).
    yc = jax.block_until_ready(fft_module(x, adjoint=False, centered=True))
    yc_ref = jnp.fft.fftshift(
        jnp.fft.fftn(jnp.fft.ifftshift(x, axes=(-2, -1)),
                     axes=(-2, -1), norm="ortho"), axes=(-2, -1))
    errc = float(jnp.max(jnp.abs(yc - yc_ref)))
    assert errc < tol, f"centered max abs error too large: {errc}"

    print("KERNEL_OK")
</pallas_src>

<mosaic_0001>
module attributes {stable_mosaic.version = 11 : i64} {
  func.func @_kron_kernel(%arg0: i32, %arg1: memref<8x512xf32, #tpu.memory_space<vmem>>, %arg2: memref<512x512xf32, #tpu.memory_space<vmem>>, %arg3: memref<8x512xf32, #tpu.memory_space<vmem>>) attributes {dimension_semantics = [#tpu.dimension_semantics<parallel>], iteration_bounds = array<i64: 1>, scalar_prefetch = 0 : i64, scratch_operands = 0 : i64, tpu.core_type = #tpu.core_type<tc>, window_params = [{transform_indices = @transform_0, window_bounds = array<i64: 8, 512>}, {pipeline_mode = #tpu.pipeline_mode<synchronous>, transform_indices = @transform_1, window_bounds = array<i64: 512, 512>}, {transform_indices = @transform_2, window_bounds = array<i64: 8, 512>}]} {
    %c0 = arith.constant 0 : index
    %c0_0 = arith.constant 0 : index
    %0 = vector.load %arg1[%c0, %c0_0] : memref<8x512xf32, #tpu.memory_space<vmem>>, vector<8x512xf32>
    %c0_1 = arith.constant 0 : index
    %c0_2 = arith.constant 0 : index
    %1 = vector.load %arg2[%c0_1, %c0_2] : memref<512x512xf32, #tpu.memory_space<vmem>>, vector<512x512xf32>
    %cst = arith.constant dense<0.000000e+00> : vector<8x512xf32>
    %2 = tpu.matmul %0, %1, %cst {dimension_numbers = #tpu.dot_dimension_numbers<[1], [0], [0], [1], [0, 0, 1, 1], [], []>} : vector<8x512xf32>, vector<512x512xf32>, vector<8x512xf32> -> vector<8x512xf32>
    %c0_3 = arith.constant 0 : index
    %c0_4 = arith.constant 0 : index
    %3 = vector.load %arg3[%c0_3, %c0_4] : memref<8x512xf32, #tpu.memory_space<vmem>>, vector<8x512xf32>
    tpu.vector_store %arg3[%c0_3, %c0_4], %2 {strides = array<i32>} : memref<8x512xf32, #tpu.memory_space<vmem>>, vector<8x512xf32>,
    return
  }
  func.func @transform_0(%arg0: i32) -> (i32, i32) {
    %c0_i32 = arith.constant 0 : i32
    %c0_i32_0 = arith.constant 0 : i32
    return %arg0, %c0_i32 : i32, i32
  }
  func.func @transform_1(%arg0: i32) -> (i32, i32) {
    %c0_i32 = arith.constant 0 : i32
    %c0_i32_0 = arith.constant 0 : i32
    %c0_i32_1 = arith.constant 0 : i32
    return %c0_i32, %c0_i32_0 : i32, i32
  }
  func.func @transform_2(%arg0: i32) -> (i32, i32) {
    %c0_i32 = arith.constant 0 : i32
    %c0_i32_0 = arith.constant 0 : i32
    return %arg0, %c0_i32 : i32, i32
  }
}

</mosaic_0001>

<llo_original>
// kernel: neg.1
$region0: #{neg.1}
  #allocation0 [shape = 's32[1]{0}', space=sflag, size = 0x4, scoped, tag = 'scoped memory for neg.1']
  %s0 = inlined_call_operand.vmem [shape: f32[256,256], index: 0, kind: input, shape index: {}]
  %s1 = inlined_call_operand.vmem [shape: f32[256,256], index: 1, kind: output, shape index: {}]
  %v2 = vld [vmem:[%s0] sm:$0xff]
  %3 = xla_tuple %v2
  %4 = xla_tuple %3
  %v5 = vxor.u32 %v2, 2147483648
  %6 = xla_tuple %v5
  %7 = vst [vmem:[%s1] sm:$0xff] %v5
  %s8 = scalar_lea.vmem %s0, 16
  %v9 = vld [vmem:[%s8] sm:$0xff]
  %10 = xla_tuple %v9
  %11 = xla_tuple %10
  %v12 = vxor.u32 %v9, 2147483648
  %13 = xla_tuple %v12
  %s14 = scalar_lea.vmem %s1, 16
  %15 = vst [vmem:[%s14] sm:$0xff] %v12
  %s16 = scalar_lea.vmem %s0, 32
  %v17 = vld [vmem:[%s16] sm:$0xff]
  %18 = xla_tuple %v17
  %19 = xla_tuple %18
  %v20 = vxor.u32 %v17, 2147483648
  %21 = xla_tuple %v20
  %s22 = scalar_lea.vmem %s1, 32
  %23 = vst [vmem:[%s22] sm:$0xff] %v20
  %s24 = scalar_lea.vmem %s0, 48
  %v25 = vld [vmem:[%s24] sm:$0xff]
  %26 = xla_tuple %v25
  %27 = xla_tuple %26
  %v28 = vxor.u32 %v25, 2147483648
  %29 = xla_tuple %v28
  %s30 = scalar_lea.vmem %s1, 48
  %31 = vst [vmem:[%s30] sm:$0xff] %v28
  %s32 = scalar_lea.vmem %s0, 64
  %v33 = vld [vmem:[%s32] sm:$0xff]
  %34 = xla_tuple %v33
  %35 = xla_tuple %34
  %v36 = vxor.u32 %v33, 2147483648
  %37 = xla_tuple %v36
  %s38 = scalar_lea.vmem %s1, 64
  %39 = vst [vmem:[%s38] sm:$0xff] %v36
  %s40 = scalar_lea.vmem %s0, 80
  %v41 = vld [vmem:[%s40] sm:$0xff]
  %42 = xla_tuple %v41
  %43 = xla_tuple %42
  %v44 = vxor.u32 %v41, 2147483648
  %45 = xla_tuple %v44
  %s46 = scalar_lea.vmem %s1, 80
  %47 = vst [vmem:[%s46] sm:$0xff] %v44
  %s48 = scalar_lea.vmem %s0, 96
  %v49 = vld [vmem:[%s48] sm:$0xff]
  %50 = xla_tuple %v49
  %51 = xla_tuple %50
  %v52 = vxor.u32 %v49, 2147483648
  %53 = xla_tuple %v52
  %s54 = scalar_lea.vmem %s1, 96
  %55 = vst [vmem:[%s54] sm:$0xff] %v52
  %s56 = scalar_lea.vmem %s0, 112
  %v57 = vld [vmem:[%s56] sm:$0xff]
  %58 = xla_tuple %v57
  %59 = xla_tuple %58
  %v60 = vxor.u32 %v57, 2147483648
  %61 = xla_tuple %v60
  %s62 = scalar_lea.vmem %s1, 112
  %63 = vst [vmem:[%s62] sm:$0xff] %v60
  %s64 = scalar_lea.vmem %s0, 128
  %v65 = vld [vmem:[%s64] sm:$0xff]
  %66 = xla_tuple %v65
  %67 = xla_tuple %66
  %v68 = vxor.u32 %v65, 2147483648
  %69 = xla_tuple %v68
  %s70 = scalar_lea.vmem %s1, 128
  %71 = vst [vmem:[%s70] sm:$0xff] %v68
  %s72 = scalar_lea.vmem %s0, 144
  %v73 = vld [vmem:[%s72] sm:$0xff]
  %74 = xla_tuple %v73
  %75 = xla_tuple %74
  %v76 = vxor.u32 %v73, 2147483648
  %77 = xla_tuple %v76
  %s78 = scalar_lea.vmem %s1, 144
  %79 = vst [vmem:[%s78] sm:$0xff] %v76
  %s80 = scalar_lea.vmem %s0, 160
  %v81 = vld [vmem:[%s80] sm:$0xff]
  %82 = xla_tuple %v81
  %83 = xla_tuple %82
  %v84 = vxor.u32 %v81, 2147483648
  %85 = xla_tuple %v84
  %s86 = scalar_lea.vmem %s1, 160
  %87 = vst [vmem:[%s86] sm:$0xff] %v84
  %s88 = scalar_lea.vmem %s0, 176
  %v89 = vld [vmem:[%s88] sm:$0xff]
  %90 = xla_tuple %v89
  %91 = xla_tuple %90
  %v92 = vxor.u32 %v89, 2147483648
  %93 = xla_tuple %v92
  %s94 = scalar_lea.vmem %s1, 176
  %95 = vst [vmem:[%s94] sm:$0xff] %v92
  %s96 = scalar_lea.vmem %s0, 192
  %v97 = vld [vmem:[%s96] sm:$0xff]
  %98 = xla_tuple %v97
  %99 = xla_tuple %98
  %v100 = vxor.u32 %v97, 2147483648
  %101 = xla_tuple %v100
  %s102 = scalar_lea.vmem %s1, 192
  %103 = vst [vmem:[%s102] sm:$0xff] %v100
  %s104 = scalar_lea.vmem %s0, 208
  %v105 = vld [vmem:[%s104] sm:$0xff]
  %106 = xla_tuple %v105
  %107 = xla_tuple %106
  %v108 = vxor.u32 %v105, 2147483648
  %109 = xla_tuple %v108
  %s110 = scalar_lea.vmem %s1, 208
  %111 = vst [vmem:[%s110] sm:$0xff] %v108
  %s112 = scalar_lea.vmem %s0, 224
  %v113 = vld [vmem:[%s112] sm:$0xff]
  %114 = xla_tuple %v113
  %115 = xla_tuple %114
  %v116 = vxor.u32 %v113, 2147483648
  %117 = xla_tuple %v116
  %s118 = scalar_lea.vmem %s1, 224
  %119 = vst [vmem:[%s118] sm:$0xff] %v116
  %s120 = scalar_lea.vmem %s0, 240
  %v121 = vld [vmem:[%s120] sm:$0xff]
  %122 = xla_tuple %v121
  %123 = xla_tuple %122
  %v124 = vxor.u32 %v121, 2147483648
  %125 = xla_tuple %v124
  %s126 = scalar_lea.vmem %s1, 240
  %127 = vst [vmem:[%s126] sm:$0xff] %v124
  %s128 = scalar_lea.vmem %s0, 256
  %v129 = vld [vmem:[%s128] sm:$0xff]
  %130 = xla_tuple %v129
  %131 = xla_tuple %130
  %v132 = vxor.u32 %v129, 2147483648
  %133 = xla_tuple %v132
  %s134 = scalar_lea.vmem %s1, 256
  %135 = vst [vmem:[%s134] sm:$0xff] %v132
  %s136 = scalar_lea.vmem %s0, 272
  %v137 = vld [vmem:[%s136] sm:$0xff]
  %138 = xla_tuple %v137
  %139 = xla_tuple %138
  %v140 = vxor.u32 %v137, 2147483648
  %141 = xla_tuple %v140
  %s142 = scalar_lea.vmem %s1, 272
  %143 = vst [vmem:[%s142] sm:$0xff] %v140
  %s144 = scalar_lea.vmem %s0, 288
  %v145 = vld [vmem:[%s144] sm:$0xff]
  %146 = xla_tuple %v145
  %147 = xla_tuple %146
  %v148 = vxor.u32 %v145, 2147483648
  %149 = xla_tuple %v148
  %s150 = scalar_lea.vmem %s1, 288
  %151 = vst [vmem:[%s150] sm:$0xff] %v148
  %s152 = scalar_lea.vmem %s0, 304
  %v153 = vld [vmem:[%s152] sm:$0xff]
  %154 = xla_tuple %v153
  %155 = xla_tuple %154
  %v156 = vxor.u32 %v153, 2147483648
  %157 = xla_tuple %v156
  %s158 = scalar_lea.vmem %s1, 304
  %159 = vst [vmem:[%s158] sm:$0xff] %v156
  %s160 = scalar_lea.vmem %s0, 320
  %v161 = vld [vmem:[%s160] sm:$0xff]
  %162 = xla_tuple %v161
  %163 = xla_tuple %162
  %v164 = vxor.u32 %v161, 2147483648
  %165 = xla_tuple %v164
  %s166 = scalar_lea.vmem %s1, 320
  %167 = vst [vmem:[%s166] sm:$0xff] %v164
  %s168 = scalar_lea.vmem %s0, 336
  %v169 = vld [vmem:[%s168] sm:$0xff]
  %170 = xla_tuple %v169
  %171 = xla_tuple %170
  %v172 = vxor.u32 %v169, 2147483648
  %173 = xla_tuple %v172
  %s174 = scalar_lea.vmem %s1, 336
  %175 = vst [vmem:[%s174] sm:$0xff] %v172
  %s176 = scalar_lea.vmem %s0, 352
  %v177 = vld [vmem:[%s176] sm:$0xff]
  %178 = xla_tuple %v177
  %179 = xla_tuple %178
  %v180 = vxor.u32 %v177, 2147483648
  %181 = xla_tuple %v180
  %s182 = scalar_lea.vmem %s1, 352
  %183 = vst [vmem:[%s182] sm:$0xff] %v180
  %s184 = scalar_lea.vmem %s0, 368
  %v185 = vld [vmem:[%s184] sm:$0xff]
  %186 = xla_tuple %v185
  %187 = xla_tuple %186
  %v188 = vxor.u32 %v185, 2147483648
  %189 = xla_tuple %v188
  %s190 = scalar_lea.vmem %s1, 368
  %191 = vst [vmem:[%s190] sm:$0xff] %v188
  %s192 = scalar_lea.vmem %s0, 384
  %v193 = vld [vmem:[%s192] sm:$0xff]
  %194 = xla_tuple %v193
  %195 = xla_tuple %194
  %v196 = vxor.u32 %v193, 2147483648
  %197 = xla_tuple %v196
  %s198 = scalar_lea.vmem %s1, 384
  %199 = vst [vmem:[%s198] sm:$0xff] %v196
  %s200 = scalar_lea.vmem %s0, 400
  %v201 = vld [vmem:[%s200] sm:$0xff]
  %202 = xla_tuple %v201
  %203 = xla_tuple %202
  %v204 = vxor.u32 %v201, 2147483648
  %205 = xla_tuple %v204
  %s206 = scalar_lea.vmem %s1, 400
  %207 = vst [vmem:[%s206] sm:$0xff] %v204
  %s208 = scalar_lea.vmem %s0, 416
  %v209 = vld [vmem:[%s208] sm:$0xff]
  %210 = xla_tuple %v209
  %211 = xla_tuple %210
  %v212 = vxor.u32 %v209, 2147483648
  %213 = xla_tuple %v212
  %s214 = scalar_lea.vmem %s1, 416
  %215 = vst [vmem:[%s214] sm:$0xff] %v212
  %s216 = scalar_lea.vmem %s0, 432
  %v217 = vld [vmem:[%s216] sm:$0xff]
  %218 = xla_tuple %v217
  %219 = xla_tuple %218
  %v220 = vxor.u32 %v217, 2147483648
  %221 = xla_tuple %v220
  %s222 = scalar_lea.vmem %s1, 432
  %223 = vst [vmem:[%s222] sm:$0xff] %v220
  %s224 = scalar_lea.vmem %s0, 448
  %v225 = vld [vmem:[%s224] sm:$0xff]
  %226 = xla_tuple %v225
  %227 = xla_tuple %226
  %v228 = vxor.u32 %v225, 2147483648
  %229 = xla_tuple %v228
  %s230 = scalar_lea.vmem %s1, 448
  %231 = vst [vmem:[%s230] sm:$0xff] %v228
  %s232 = scalar_lea.vmem %s0, 464
  %v233 = vld [vmem:[%s232] sm:$0xff]
  %234 = xla_tuple %v233
  %235 = xla_tuple %234
  %v236 = vxor.u32 %v233, 2147483648
  %237 = xla_tuple %v236
  %s238 = scalar_lea.vmem %s1, 464
  %239 = vst [vmem:[%s238] sm:$0xff] %v236
  %s240 = scalar_lea.vmem %s0, 480
  %v241 = vld [vmem:[%s240] sm:$0xff]
  %242 = xla_tuple %v241
  %243 = xla_tuple %242
  %v244 = vxor.u32 %v241, 2147483648
  %245 = xla_tuple %v244
  %s246 = scalar_lea.vmem %s1, 480
  %247 = vst [vmem:[%s246] sm:$0xff] %v244
  %s248 = scalar_lea.vmem %s0, 496
  %v249 = vld [vmem:[%s248] sm:$0xff]
  %250 = xla_tuple %v249
  %251 = xla_tuple %250
  %v252 = vxor.u32 %v249, 2147483648
  %253 = xla_tuple %v252
  %s254 = scalar_lea.vmem %s1, 496
  %255 = vst [vmem:[%s254] sm:$0xff] %v252
  %s256 = scalar_lea.vmem %s0, 8
  %v257 = vld [vmem:[%s256] sm:$0xff]
  %258 = xla_tuple %v257
  %259 = xla_tuple %258
  %v260 = vxor.u32 %v257, 2147483648
  %261 = xla_tuple %v260
  %s262 = scalar_lea.vmem %s1, 8
  %263 = vst [vmem:[%s262] sm:$0xff] %v260
  %s264 = scalar_lea.vmem %s0, 24
  %v265 = vld [vmem:[%s264] sm:$0xff]
  %266 = xla_tuple %v265
  %267 = xla_tuple %266
  %v268 = vxor.u32 %v265, 2147483648
  %269 = xla_tuple %v268
  %s270 = scalar_lea.vmem %s1, 24
  %271 = vst [vmem:[%s270] sm:$0xff] %v268
  %s272 = scalar_lea.vmem %s0, 40
  %v273 = vld [vmem:[%s272] sm:$0xff]
  %274 = xla_tuple %v273
  %275 = xla_tuple %274
  %v276 = vxor.u32 %v273, 2147483648
  %277 = xla_tuple %v276
  %s278 = scalar_lea.vmem %s1, 40
  %279 = vst [vmem:[%s278] sm:$0xff] %v276
  %s280 = scalar_lea.vmem %s0, 56
  %v281 = vld [vmem:[%s280] sm:$0xff]
  %282 = xla_tuple %v281
  %283 = xla_tuple %282
  %v284 = vxor.u32 %v281, 2147483648
  %285 = xla_tuple %v284
  %s286 = scalar_lea.vmem %s1, 56
  %287 = vst [vmem:[%s286] sm:$0xff] %v284
  %s288 = scalar_lea.vmem %s0, 72
  %v289 = vld [vmem:[%s288] sm:$0xff]
  %290 = xla_tuple %v289
  %291 = xla_tuple %290
  %v292 = vxor.u32 %v289, 2147483648
  %293 = xla_tuple %v292
  %s294 = scalar_lea.vmem %s1, 72
  %295 = vst [vmem:[%s294] sm:$0xff] %v292
  %s296 = scalar_lea.vmem %s0, 88
  %v297 = vld [vmem:[%s296] sm:$0xff]
  %298 = xla_tuple %v297
  %299 = xla_tuple %298
  %v300 = vxor.u32 %v297, 2147483648
  %301 = xla_tuple %v300
  %s302 = scalar_lea.vmem %s1, 88
  %303 = vst [vmem:[%s302] sm:$0xff] %v300
  %s304 = scalar_lea.vmem %s0, 104
  %v305 = vld [vmem:[%s304] sm:$0xff]
  %306 = xla_tuple %v305
  %307 = xla_tuple %306
  %v308 = vxor.u32 %v305, 2147483648
  %309 = xla_tuple %v308
  %s310 = scalar_lea.vmem %s1, 104
  %311 = vst [vmem:[%s310] sm:$0xff] %v308
  %s312 = scalar_lea.vmem %s0, 120
  %v313 = vld [vmem:[%s312] sm:$0xff]
  %314 = xla_tuple %v313
  %315 = xla_tuple %314
  %v316 = vxor.u32 %v313, 2147483648
  %317 = xla_tuple %v316
  %s318 = scalar_lea.vmem %s1, 120
  %319 = vst [vmem:[%s318] sm:$0xff] %v316
  %s320 = scalar_lea.vmem %s0, 136
  %v321 = vld [vmem:[%s320] sm:$0xff]
  %322 = xla_tuple %v321
  %323 = xla_tuple %322
  %v324 = vxor.u32 %v321, 2147483648
  %325 = xla_tuple %v324
  %s326 = scalar_lea.vmem %s1, 136
  %327 = vst [vmem:[%s326] sm:$0xff] %v324
  %s328 = scalar_lea.vmem %s0, 152
  %v329 = vld [vmem:[%s328] sm:$0xff]
  %330 = xla_tuple %v329
  %331 = xla_tuple %330
  %v332 = vxor.u32 %v329, 2147483648
  %333 = xla_tuple %v332
  %s334 = scalar_lea.vmem %s1, 152
  %335 = vst [vmem:[%s334] sm:$0xff] %v332
  %s336 = scalar_lea.vmem %s0, 168
  %v337 = vld [vmem:[%s336] sm:$0xff]
  %338 = xla_tuple %v337
  %339 = xla_tuple %338
  %v340 = vxor.u32 %v337, 2147483648
  %341 = xla_tuple %v340
  %s342 = scalar_lea.vmem %s1, 168
  %343 = vst [vmem:[%s342] sm:$0xff] %v340
  %s344 = scalar_lea.vmem %s0, 184
  %v345 = vld [vmem:[%s344] sm:$0xff]
  %346 = xla_tuple %v345
  %347 = xla_tuple %346
  %v348 = vxor.u32 %v345, 2147483648
  %349 = xla_tuple %v348
  %s350 = scalar_lea.vmem %s1, 184
  %351 = vst [vmem:[%s350] sm:$0xff] %v348
  %s352 = scalar_lea.vmem %s0, 200
  %v353 = vld [vmem:[%s352] sm:$0xff]
  %354 = xla_tuple %v353
  %355 = xla_tuple %354
  %v356 = vxor.u32 %v353, 2147483648
  %357 = xla_tuple %v356
  %s358 = scalar_lea.vmem %s1, 200
  %359 = vst [vmem:[%s358] sm:$0xff] %v356
  %s360 = scalar_lea.vmem %s0, 216
  %v361 = vld [vmem:[%s360] sm:$0xff]
  %362 = xla_tuple %v361
  %363 = xla_tuple %362
  %v364 = vxor.u32 %v361, 2147483648
  %365 = xla_tuple %v364
  %s366 = scalar_lea.vmem %s1, 216
  %367 = vst [vmem:[%s366] sm:$0xff] %v364
  %s368 = scalar_lea.vmem %s0, 232
  %v369 = vld [vmem:[%s368] sm:$0xff]
  %370 = xla_tuple %v369
  %371 = xla_tuple %370
  %v372 = vxor.u32 %v369, 2147483648
  %373 = xla_tuple %v372
  %s374 = scalar_lea.vmem %s1, 232
  %375 = vst [vmem:[%s374] sm:$0xff] %v372
  %s376 = scalar_lea.vmem %s0, 248
  %v377 = vld [vmem:[%s376] sm:$0xff]
  %378 = xla_tuple %v377
  %379 = xla_tuple %378
  %v380 = vxor.u32 %v377, 2147483648
  %381 = xla_tuple %v380
  %s382 = scalar_lea.vmem %s1, 248
  %383 = vst [vmem:[%s382] sm:$0xff] %v380
  %s384 = scalar_lea.vmem %s0, 264
  %v385 = vld [vmem:[%s384] sm:$0xff]
  %386 = xla_tuple %v385
  %387 = xla_tuple %386
  %v388 = vxor.u32 %v385, 2147483648
  %389 = xla_tuple %v388
  %s390 = scalar_lea.vmem %s1, 264
  %391 = vst [vmem:[%s390] sm:$0xff] %v388
  %s392 = scalar_lea.vmem %s0, 280
  %v393 = vld [vmem:[%s392] sm:$0xff]
  %394 = xla_tuple %v393
  %395 = xla_tuple %394
  %v396 = vxor.u32 %v393, 2147483648
  %397 = xla_tuple %v396
  %s398 = scalar_lea.vmem %s1, 280
  %399 = vst [vmem:[%s398] sm:$0xff] %v396
  %s400 = scalar_lea.vmem %s0, 296
  %v401 = vld [vmem:[%s400] sm:$0xff]
  %402 = xla_tuple %v401
  %403 = xla_tuple %402
  %v404 = vxor.u32 %v401, 2147483648
  %405 = xla_tuple %v404
  %s406 = scalar_lea.vmem %s1, 296
  %407 = vst [vmem:[%s406] sm:$0xff] %v404
  %s408 = scalar_lea.vmem %s0, 312
  %v409 = vld [vmem:[%s408] sm:$0xff]
  %410 = xla_tuple %v409
  %411 = xla_tuple %410
  %v412 = vxor.u32 %v409, 2147483648
  %413 = xla_tuple %v412
  %s414 = scalar_lea.vmem %s1, 312
  %415 = vst [vmem:[%s414] sm:$0xff] %v412
  %s416 = scalar_lea.vmem %s0, 328
  %v417 = vld [vmem:[%s416] sm:$0xff]
  %418 = xla_tuple %v417
  %419 = xla_tuple %418
  %v420 = vxor.u32 %v417, 2147483648
  %421 = xla_tuple %v420
  %s422 = scalar_lea.vmem %s1, 328
  %423 = vst [vmem:[%s422] sm:$0xff] %v420
  %s424 = scalar_lea.vmem %s0, 344
  %v425 = vld [vmem:[%s424] sm:$0xff]
  %426 = xla_tuple %v425
  %427 = xla_tuple %426
  %v428 = vxor.u32 %v425, 2147483648
  %429 = xla_tuple %v428
  %s430 = scalar_lea.vmem %s1, 344
  %431 = vst [vmem:[%s430] sm:$0xff] %v428
  %s432 = scalar_lea.vmem %s0, 360
  %v433 = vld [vmem:[%s432] sm:$0xff]
  %434 = xla_tuple %v433
  %435 = xla_tuple %434
  %v436 = vxor.u32 %v433, 2147483648
  %437 = xla_tuple %v436
  %s438 = scalar_lea.vmem %s1, 360
  %439 = vst [vmem:[%s438] sm:$0xff] %v436
  %s440 = scalar_lea.vmem %s0, 376
  %v441 = vld [vmem:[%s440] sm:$0xff]
  %442 = xla_tuple %v441
  %443 = xla_tuple %442
  %v444 = vxor.u32 %v441, 2147483648
  %445 = xla_tuple %v444
  %s446 = scalar_lea.vmem %s1, 376
  %447 = vst [vmem:[%s446] sm:$0xff] %v444
  %s448 = scalar_lea.vmem %s0, 392
  %v449 = vld [vmem:[%s448] sm:$0xff]
  %450 = xla_tuple %v449
  %451 = xla_tuple %450
  %v452 = vxor.u32 %v449, 2147483648
  %453 = xla_tuple %v452
  %s454 = scalar_lea.vmem %s1, 392
  %455 = vst [vmem:[%s454] sm:$0xff] %v452
  %s456 = scalar_lea.vmem %s0, 408
  %v457 = vld [vmem:[%s456] sm:$0xff]
  %458 = xla_tuple %v457
  %459 = xla_tuple %458
  %v460 = vxor.u32 %v457, 2147483648
  %461 = xla_tuple %v460
  %s462 = scalar_lea.vmem %s1, 408
  %463 = vst [vmem:[%s462] sm:$0xff] %v460
  %s464 = scalar_lea.vmem %s0, 424
  %v465 = vld [vmem:[%s464] sm:$0xff]
  %466 = xla_tuple %v465
  %467 = xla_tuple %466
  %v468 = vxor.u32 %v465, 2147483648
  %469 = xla_tuple %v468
  %s470 = scalar_lea.vmem %s1, 424
  %471 = vst [vmem:[%s470] sm:$0xff] %v468
  %s472 = scalar_lea.vmem %s0, 440
  %v473 = vld [vmem:[%s472] sm:$0xff]
  %474 = xla_tuple %v473
  %475 = xla_tuple %474
  %v476 = vxor.u32 %v473, 2147483648
  %477 = xla_tuple %v476
  %s478 = scalar_lea.vmem %s1, 440
  %479 = vst [vmem:[%s478] sm:$0xff] %v476
  %s480 = scalar_lea.vmem %s0, 456
  %v481 = vld [vmem:[%s480] sm:$0xff]
  %482 = xla_tuple %v481
  %483 = xla_tuple %482
  %v484 = vxor.u32 %v481, 2147483648
  %485 = xla_tuple %v484
  %s486 = scalar_lea.vmem %s1, 456
  %487 = vst [vmem:[%s486] sm:$0xff] %v484
  %s488 = scalar_lea.vmem %s0, 472
  %v489 = vld [vmem:[%s488] sm:$0xff]
  %490 = xla_tuple %v489
  %491 = xla_tuple %490
  %v492 = vxor.u32 %v489, 2147483648
  %493 = xla_tuple %v492
  %s494 = scalar_lea.vmem %s1, 472
  %495 = vst [vmem:[%s494] sm:$0xff] %v492
  %s496 = scalar_lea.vmem %s0, 488
  %v497 = vld [vmem:[%s496] sm:$0xff]
  %498 = xla_tuple %v497
  %499 = xla_tuple %498
  %v500 = vxor.u32 %v497, 2147483648
  %501 = xla_tuple %v500
  %s502 = scalar_lea.vmem %s1, 488
  %503 = vst [vmem:[%s502] sm:$0xff] %v500
  %s504 = scalar_lea.vmem %s0, 504
  %v505 = vld [vmem:[%s504] sm:$0xff]
  %506 = xla_tuple %v505
  %507 = xla_tuple %506
  %v508 = vxor.u32 %v505, 2147483648
  %509 = xla_tuple %v508
  %s510 = scalar_lea.vmem %s1, 504
  %511 = vst [vmem:[%s510] sm:$0xff] %v508

// kernel: custom-call
$region0: #{custom-call}
  %s0 = inlined_call_operand.hbm [shape: c64[2,4,16,16], index: 0, kind: input, shape index: {}]
  %s1 = inlined_call_operand.vmem [shape: f32[2,4,16,16], index: 1, kind: output, shape index: {}]
  $region1: #{custom-call} parent=0
    #allocation0 [shape = 's32[1]{0}', space=sflag, size = 0x4, scoped, tag = 'scoped memory for custom-call']
    %2 = vsyncpa [#allocation0], 0
    %s3 = sshll.u32 %s1, 4
    %s4 = int_to_ptr.vmem [resolvable:$true] %s3
    %6 = dma.hbm_to_vmem [thread:$0]  %s0, 2048, %s4, [#allocation0]
    %7 = dma.done [#allocation0], 2048
    %8 = vsyncpa [#allocation0], 1

// kernel: custom-call.1
$region0: #{custom-call.1}
  %s0 = inlined_call_operand.hbm [shape: c64[2,4,16,16], index: 0, kind: input, shape index: {}]
  %s1 = inlined_call_operand.vmem [shape: f32[2,4,16,16], index: 1, kind: output, shape index: {}]
  %s2 = scalar_lea.hbm %s0, 2048
  $region1: #{custom-call.1} parent=0
    #allocation0 [shape = 's32[1]{0}', space=sflag, size = 0x4, scoped, tag = 'scoped memory for custom-call.1']
    %3 = vsyncpa [#allocation0], 0
    %s4 = sshll.u32 %s1, 4
    %s5 = int_to_ptr.vmem [resolvable:$true] %s4
    %7 = dma.hbm_to_vmem [thread:$0]  %s2, 2048, %s5, [#allocation0]
    %8 = dma.done [#allocation0], 2048
    %9 = vsyncpa [#allocation0], 1

// kernel: custom-call.2
$region0: #{custom-call.2}
  %s0 = inlined_call_operand.vmem [shape: f32[2,4,16,16], index: 0, kind: input, shape index: {}]
  %s1 = inlined_call_operand.vmem [shape: f32[2,4,16,16], index: 1, kind: input, shape index: {}]
  %s2 = inlined_call_operand.hbm [shape: c64[2,4,16,16], index: 2, kind: output, shape index: {}]
  %s3 = scalar_lea.hbm %s2, 2048
  $region1: #{custom-call.2} parent=0
    #allocation0 [shape = 's32[1]{0}', space=sflag, size = 0x4, scoped, tag = 'scoped memory for custom-call.2']
    %4 = vsyncpa [#allocation0], 0
    %s5 = sshll.u32 %s0, 4
    %s6 = int_to_ptr.vmem [resolvable:$true] %s5
    %8 = dma.vmem_to_hbm [thread:$0]  %s6, 2048, %s2, [#allocation0]
    %9 = dma.done [#allocation0], 2048
    %10 = vsyncpa [#allocation0], 1
  $region2: #{custom-call.2} parent=0
    #allocation1 [shape = 's32[1]{0}', space=sflag, size = 0x4, scoped, tag = 'scoped memory for custom-call.2']
    %11 = vsyncpa [#allocation1], 0
    %s12 = sshll.u32 %s1, 4
    %s13 = int_to_ptr.vmem [resolvable:$true] %s12
    %15 = dma.vmem_to_hbm [thread:$0]  %s13, 2048, %s3, [#allocation1]
    %16 = dma.done [#allocation1], 2048
    %17 = vsyncpa [#allocation1], 1

// kernel: fft_module.1
$region0: #{fft_module.1}
  #allocation0 [shape = 'u32[]', space=smem, size = 0x4, offset = 0x4, fixed_abs, tag = 'smem constant byte address 0x4 - core index']
  #allocation1 [shape = 'u32[144,128]{1,0:T(1,128)}', space=vmem, size = 0x12000, scoped, tag = 'internal scratch']
  %s0 = inlined_call_operand.vmem [shape: f32[8,512], index: 0, kind: input, shape index: {}]
  %s1 = inlined_call_operand.vmem [shape: f32[512,512], index: 1, kind: input, shape index: {}]
  %s2 = inlined_call_operand.vmem [shape: f32[8,512], index: 2, kind: output, shape index: {}]
  %s3 = sld [smem:[#allocation0]]
  $region18: #{fft_module.1} parent=0
    _
  %s5 = ssub.s32 1, %s3
  %s6 = scalar_select 0, %s5, %s3
  // Predicated region
  $region2: #{fft_module.1} parent=0 // pred_check
    _
  $region3: #{fft_module.1} parent=0 // pred_check_branch
    %8 = sbr.rel (0) target = $region5
  $region4: #{fft_module.1} parent=0 // pred_region
    _
  $region5: #{fft_module.1} parent=0 // pred_fallthru
    _
  // Predicated region
  $region6: #{fft_module.1} parent=0 // pred_check
    _
  $region7: #{fft_module.1} parent=0 // pred_check_branch
    %10 = sbr.rel (0) target = $region9
  $region8: #{fft_module.1} parent=0 // pred_region
    _
  $region9: #{fft_module.1} parent=0 // pred_fallthru
    _
  %v11 = vld [vmem:[%s0] sm:$0xff]
  %v12 = vld [vmem:[%s0 + $0x8] sm:$0xff]
  %v13 = vld [vmem:[%s0 + $0x10] sm:$0xff]
  %v14 = vld [vmem:[%s0 + $0x18] sm:$0xff]
  %v15 = vld [vmem:[%s1] sm:$0xff]
  %v16 = vld [vmem:[%s1 + $0x8] sm:$0xff]
  %v17 = vld [vmem:[%s1 + $0x10] sm:$0xff]
  %v18 = vld [vmem:[%s1 + $0x18] sm:$0xff]
  %v19 = vld [vmem:[%s1 + $0x20] sm:$0xff]
  %v20 = vld [vmem:[%s1 + $0x28] sm:$0xff]
  %v21 = vld [vmem:[%s1 + $0x30] sm:$0xff]
  %v22 = vld [vmem:[%s1 + $0x38] sm:$0xff]
  %v23 = vld [vmem:[%s1 + $0x40] sm:$0xff]
  %v24 = vld [vmem:[%s1 + $0x48] sm:$0xff]
  %v25 = vld [vmem:[%s1 + $0x50] sm:$0xff]
  %v26 = vld [vmem:[%s1 + $0x58] sm:$0xff]
  %v27 = vld [vmem:[%s1 + $0x60] sm:$0xff]
  %v28 = vld [vmem:[%s1 + $0x68] sm:$0xff]
  %v29 = vld [vmem:[%s1 + $0x70] sm:$0xff]
  %v30 = vld [vmem:[%s1 + $0x78] sm:$0xff]
  %v31 = vld [vmem:[%s1 + $0x80] sm:$0xff]
  %v32 = vld [vmem:[%s1 + $0x88] sm:$0xff]
  %v33 = vld [vmem:[%s1 + $0x90] sm:$0xff]
  %v34 = vld [vmem:[%s1 + $0x98] sm:$0xff]
  %v35 = vld [vmem:[%s1 + $0xa0] sm:$0xff]
  %v36 = vld [vmem:[%s1 + $0xa8] sm:$0xff]
  %v37 = vld [vmem:[%s1 + $0xb0] sm:$0xff]
  %v38 = vld [vmem:[%s1 + $0xb8] sm:$0xff]
  %v39 = vld [vmem:[%s1 + $0xc0] sm:$0xff]
  %v40 = vld [vmem:[%s1 + $0xc8] sm:$0xff]
  %v41 = vld [vmem:[%s1 + $0xd0] sm:$0xff]
  %v42 = vld [vmem:[%s1 + $0xd8] sm:$0xff]
  %v43 = vld [vmem:[%s1 + $0xe0] sm:$0xff]
  %v44 = vld [vmem:[%s1 + $0xe8] sm:$0xff]
  %v45 = vld [vmem:[%s1 + $0xf0] sm:$0xff]
  %v46 = vld [vmem:[%s1 + $0xf8] sm:$0xff]
  %v47 = vld [vmem:[%s1 + $0x100] sm:$0xff]
  %v48 = vld [vmem:[%s1 + $0x108] sm:$0xff]
  %v49 = vld [vmem:[%s1 + $0x110] sm:$0xff]
  %v50 = vld [vmem:[%s1 + $0x118] sm:$0xff]
  %v51 = vld [vmem:[%s1 + $0x120] sm:$0xff]
  %v52 = vld [vmem:[%s1 + $0x128] sm:$0xff]
  %v53 = vld [vmem:[%s1 + $0x130] sm:$0xff]
  %v54 = vld [vmem:[%s1 + $0x138] sm:$0xff]
  %v55 = vld [vmem:[%s1 + $0x140] sm:$0xff]
  %v56 = vld [vmem:[%s1 + $0x148] sm:$0xff]
  %v57 = vld [vmem:[%s1 + $0x150] sm:$0xff]
  %v58 = vld [vmem:[%s1 + $0x158] sm:$0xff]
  %v59 = vld [vmem:[%s1 + $0x160] sm:$0xff]
  %v60 = vld [vmem:[%s1 + $0x168] sm:$0xff]
  %v61 = vld [vmem:[%s1 + $0x170] sm:$0xff]
  %v62 = vld [vmem:[%s1 + $0x178] sm:$0xff]
  %v63 = vld [vmem:[%s1 + $0x180] sm:$0xff]
  %v64 = vld [vmem:[%s1 + $0x188] sm:$0xff]
  %v65 = vld [vmem:[%s1 + $0x190] sm:$0xff]
  %v66 = vld [vmem:[%s1 + $0x198] sm:$0xff]
  %v67 = vld [vmem:[%s1 + $0x1a0] sm:$0xff]
  %v68 = vld [vmem:[%s1 + $0x1a8] sm:$0xff]
  %v69 = vld [vmem:[%s1 + $0x1b0] sm:$0xff]
  %v70 = vld [vmem:[%s1 + $0x1b8] sm:$0xff]
  %v71 = vld [vmem:[%s1 + $0x1c0] sm:$0xff]
  %v72 = vld [vmem:[%s1 + $0x1c8] sm:$0xff]
  %v73 = vld [vmem:[%s1 + $0x1d0] sm:$0xff]
  %v74 = vld [vmem:[%s1 + $0x1d8] sm:$0xff]
  %v75 = vld [vmem:[%s1 + $0x1e0] sm:$0xff]
  %v76 = vld [vmem:[%s1 + $0x1e8] sm:$0xff]
  %v77 = vld [vmem:[%s1 + $0x1f0] sm:$0xff]
  %v78 = vld [vmem:[%s1 + $0x1f8] sm:$0xff]
  %v79 = vld [vmem:[%s1 + $0x200] sm:$0xff]
  %v80 = vld [vmem:[%s1 + $0x208] sm:$0xff]
  %v81 = vld [vmem:[%s1 + $0x210] sm:$0xff]
  %v82 = vld [vmem:[%s1 + $0x218] sm:$0xff]
  %v83 = vld [vmem:[%s1 + $0x220] sm:$0xff]
  %v84 = vld [vmem:[%s1 + $0x228] sm:$0xff]
  %v85 = vld [vmem:[%s1 + $0x230] sm:$0xff]
  %v86 = vld [vmem:[%s1 + $0x238] sm:$0xff]
  %v87 = vld [vmem:[%s1 + $0x240] sm:$0xff]
  %v88 = vld [vmem:[%s1 + $0x248] sm:$0xff]
  %v89 = vld [vmem:[%s1 + $0x250] sm:$0xff]
  %v90 = vld [vmem:[%s1 + $0x258] sm:$0xff]
  %v91 = vld [vmem:[%s1 + $0x260] sm:$0xff]
  %v92 = vld [vmem:[%s1 + $0x268] sm:$0xff]
  %v93 = vld [vmem:[%s1 + $0x270] sm:$0xff]
  %v94 = vld [vmem:[%s1 + $0x278] sm:$0xff]
  %v95 = vld [vmem:[%s1 + $0x280] sm:$0xff]
  %v96 = vld [vmem:[%s1 + $0x288] sm:$0xff]
  %v97 = vld [vmem:[%s1 + $0x290] sm:$0xff]
  %v98 = vld [vmem:[%s1 + $0x298] sm:$0xff]
  %v99 = vld [vmem:[%s1 + $0x2a0] sm:$0xff]
  %v100 = vld [vmem:[%s1 + $0x2a8] sm:$0xff]
  %v101 = vld [vmem:[%s1 + $0x2b0] sm:$0xff]
  %v102 = vld [vmem:[%s1 + $0x2b8] sm:$0xff]
  %v103 = vld [vmem:[%s1 + $0x2c0] sm:$0xff]
  %v104 = vld [vmem:[%s1 + $0x2c8] sm:$0xff]
  %v105 = vld [vmem:[%s1 + $0x2d0] sm:$0xff]
  %v106 = vld [vmem:[%s1 + $0x2d8] sm:$0xff]
  %v107 = vld [vmem:[%s1 + $0x2e0] sm:$0xff]
  %v108 = vld [vmem:[%s1 + $0x2e8] sm:$0xff]
  %v109 = vld [vmem:[%s1 + $0x2f0] sm:$0xff]
  %v110 = vld [vmem:[%s1 + $0x2f8] sm:$0xff]
  %v111 = vld [vmem:[%s1 + $0x300] sm:$0xff]
  %v112 = vld [vmem:[%s1 + $0x308] sm:$0xff]
  %v113 = vld [vmem:[%s1 + $0x310] sm:$0xff]
  %v114 = vld [vmem:[%s1 + $0x318] sm:$0xff]
  %v115 = vld [vmem:[%s1 + $0x320] sm:$0xff]
  %v116 = vld [vmem:[%s1 + $0x328] sm:$0xff]
  %v117 = vld [vmem:[%s1 + $0x330] sm:$0xff]
  %v118 = vld [vmem:[%s1 + $0x338] sm:$0xff]
  %v119 = vld [vmem:[%s1 + $0x340] sm:$0xff]
  %v120 = vld [vmem:[%s1 + $0x348] sm:$0xff]
  %v121 = vld [vmem:[%s1 + $0x350] sm:$0xff]
  %v122 = vld [vmem:[%s1 + $0x358] sm:$0xff]
  %v123 = vld [vmem:[%s1 + $0x360] sm:$0xff]
  %v124 = vld [vmem:[%s1 + $0x368] sm:$0xff]
  %v125 = vld [vmem:[%s1 + $0x370] sm:$0xff]
  %v126 = vld [vmem:[%s1 + $0x378] sm:$0xff]
  %v127 = vld [vmem:[%s1 + $0x380] sm:$0xff]
  %v128 = vld [vmem:[%s1 + $0x388] sm:$0xff]
  %v129 = vld [vmem:[%s1 + $0x390] sm:$0xff]
  %v130 = vld [vmem:[%s1 + $0x398] sm:$0xff]
  %v131 = vld [vmem:[%s1 + $0x3a0] sm:$0xff]
  %v132 = vld [vmem:[%s1 + $0x3a8] sm:$0xff]
  %v133 = vld [vmem:[%s1 + $0x3b0] sm:$0xff]
  %v134 = vld [vmem:[%s1 + $0x3b8] sm:$0xff]
  %v135 = vld [vmem:[%s1 + $0x3c0] sm:$0xff]
  %v136 = vld [vmem:[%s1 + $0x3c8] sm:$0xff]
  %v137 = vld [vmem:[%s1 + $0x3d0] sm:$0xff]
  %v138 = vld [vmem:[%s1 + $0x3d8] sm:$0xff]
  %v139 = vld [vmem:[%s1 + $0x3e0] sm:$0xff]
  %v140 = vld [vmem:[%s1 + $0x3e8] sm:$0xff]
  %v141 = vld [vmem:[%s1 + $0x3f0] sm:$0xff]
  %v142 = vld [vmem:[%s1 + $0x3f8] sm:$0xff]
  %v143 = vld [vmem:[%s1 + $0x400] sm:$0xff]
  %v144 = vld [vmem:[%s1 + $0x408] sm:$0xff]
  %v145 = vld [vmem:[%s1 + $0x410] sm:$0xff]
  %v146 = vld [vmem:[%s1 + $0x418] sm:$0xff]
  %v147 = vld [vmem:[%s1 + $0x420] sm:$0xff]
  %v148 = vld [vmem:[%s1 + $0x428] sm:$0xff]
  %v149 = vld [vmem:[%s1 + $0x430] sm:$0xff]
  %v150 = vld [vmem:[%s1 + $0x438] sm:$0xff]
  %v151 = vld [vmem:[%s1 + $0x440] sm:$0xff]
  %v152 = vld [vmem:[%s1 + $0x448] sm:$0xff]
  %v153 = vld [vmem:[%s1 + $0x450] sm:$0xff]
  %v154 = vld [vmem:[%s1 + $0x458] sm:$0xff]
  %v155 = vld [vmem:[%s1 + $0x460] sm:$0xff]
  %v156 = vld [vmem:[%s1 + $0x468] sm:$0xff]
  %v157 = vld [vmem:[%s1 + $0x470] sm:$0xff]
  %v158 = vld [vmem:[%s1 + $0x478] sm:$0xff]
  %v159 = vld [vmem:[%s1 + $0x480] sm:$0xff]
  %v160 = vld [vmem:[%s1 + $0x488] sm:$0xff]
  %v161 = vld [vmem:[%s1 + $0x490] sm:$0xff]
  %v162 = vld [vmem:[%s1 + $0x498] sm:$0xff]
  %v163 = vld [vmem:[%s1 + $0x4a0] sm:$0xff]
  %v164 = vld [vmem:[%s1 + $0x4a8] sm:$0xff]
  %v165 = vld [vmem:[%s1 + $0x4b0] sm:$0xff]
  %v166 = vld [vmem:[%s1 + $0x4b8] sm:$0xff]
  %v167 = vld [vmem:[%s1 + $0x4c0] sm:$0xff]
  %v168 = vld [vmem:[%s1 + $0x4c8] sm:$0xff]
  %v169 = vld [vmem:[%s1 + $0x4d0] sm:$0xff]
  %v170 = vld [vmem:[%s1 + $0x4d8] sm:$0xff]
  %v171 = vld [vmem:[%s1 + $0x4e0] sm:$0xff]
  %v172 = vld [vmem:[%s1 + $0x4e8] sm:$0xff]
  %v173 = vld [vmem:[%s1 + $0x4f0] sm:$0xff]
  %v174 = vld [vmem:[%s1 + $0x4f8] sm:$0xff]
  %v175 = vld [vmem:[%s1 + $0x500] sm:$0xff]
  %v176 = vld [vmem:[%s1 + $0x508] sm:$0xff]
  %v177 = vld [vmem:[%s1 + $0x510] sm:$0xff]
  %v178 = vld [vmem:[%s1 + $0x518] sm:$0xff]
  %v179 = vld [vmem:[%s1 + $0x520] sm:$0xff]
  %v180 = vld [vmem:[%s1 + $0x528] sm:$0xff]
  %v181 = vld [vmem:[%s1 + $0x530] sm:$0xff]
  %v182 = vld [vmem:[%s1 + $0x538] sm:$0xff]
  %v183 = vld [vmem:[%s1 + $0x540] sm:$0xff]
  %v184 = vld [vmem:[%s1 + $0x548] sm:$0xff]
  %v185 = vld [vmem:[%s1 + $0x550] sm:$0xff]
  %v186 = vld [vmem:[%s1 + $0x558] sm:$0xff]
  %v187 = vld [vmem:[%s1 + $0x560] sm:$0xff]
  %v188 = vld [vmem:[%s1 + $0x568] sm:$0xff]
  %v189 = vld [vmem:[%s1 + $0x570] sm:$0xff]
  %v190 = vld [vmem:[%s1 + $0x578] sm:$0xff]
  %v191 = vld [vmem:[%s1 + $0x580] sm:$0xff]
  %v192 = vld [vmem:[%s1 + $0x588] sm:$0xff]
  %v193 = vld [vmem:[%s1 + $0x590] sm:$0xff]
  %v194 = vld [vmem:[%s1 + $0x598] sm:$0xff]
  %v195 = vld [vmem:[%s1 + $0x5a0] sm:$0xff]
  %v196 = vld [vmem:[%s1 + $0x5a8] sm:$0xff]
  %v197 = vld [vmem:[%s1 + $0x5b0] sm:$0xff]
  %v198 = vld [vmem:[%s1 + $0x5b8] sm:$0xff]
  %v199 = vld [vmem:[%s1 + $0x5c0] sm:$0xff]
  %v200 = vld [vmem:[%s1 + $0x5c8] sm:$0xff]
  %v201 = vld [vmem:[%s1 + $0x5d0] sm:$0xff]
  %v202 = vld [vmem:[%s1 + $0x5d8] sm:$0xff]
  %v203 = vld [vmem:[%s1 + $0x5e0] sm:$0xff]
  %v204 = vld [vmem:[%s1 + $0x5e8] sm:$0xff]
  %v205 = vld [vmem:[%s1 + $0x5f0] sm:$0xff]
  %v206 = vld [vmem:[%s1 + $0x5f8] sm:$0xff]
  %v207 = vld [vmem:[%s1 + $0x600] sm:$0xff]
  %v208 = vld [vmem:[%s1 + $0x608] sm:$0xff]
  %v209 = vld [vmem:[%s1 + $0x610] sm:$0xff]
  %v210 = vld [vmem:[%s1 + $0x618] sm:$0xff]
  %v211 = vld [vmem:[%s1 + $0x620] sm:$0xff]
  %v212 = vld [vmem:[%s1 + $0x628] sm:$0xff]
  %v213 = vld [vmem:[%s1 + $0x630] sm:$0xff]
  %v214 = vld [vmem:[%s1 + $0x638] sm:$0xff]
  %v215 = vld [vmem:[%s1 + $0x640] sm:$0xff]
  %v216 = vld [vmem:[%s1 + $0x648] sm:$0xff]
  %v217 = vld [vmem:[%s1 + $0x650] sm:$0xff]
  %v218 = vld [vmem:[%s1 + $0x658] sm:$0xff]
  %v219 = vld [vmem:[%s1 + $0x660] sm:$0xff]
  %v220 = vld [vmem:[%s1 + $0x668] sm:$0xff]
  %v221 = vld [vmem:[%s1 + $0x670] sm:$0xff]
  %v222 = vld [vmem:[%s1 + $0x678] sm:$0xff]
  %v223 = vld [vmem:[%s1 + $0x680] sm:$0xff]
  %v224 = vld [vmem:[%s1 + $0x688] sm:$0xff]
  %v225 = vld [vmem:[%s1 + $0x690] sm:$0xff]
  %v226 = vld [vmem:[%s1 + $0x698] sm:$0xff]
  %v227 = vld [vmem:[%s1 + $0x6a0] sm:$0xff]
  %v228 = vld [vmem:[%s1 + $0x6a8] sm:$0xff]
  %v229 = vld [vmem:[%s1 + $0x6b0] sm:$0xff]
  %v230 = vld [vmem:[%s1 + $0x6b8] sm:$0xff]
  %v231 = vld [vmem:[%s1 + $0x6c0] sm:$0xff]
  %v232 = vld [vmem:[%s1 + $0x6c8] sm:$0xff]
  %v233 = vld [vmem:[%s1 + $0x6d0] sm:$0xff]
  %v234 = vld [vmem:[%s1 + $0x6d8] sm:$0xff]
  %v235 = vld [vmem:[%s1 + $0x6e0] sm:$0xff]
  %v236 = vld [vmem:[%s1 + $0x6e8] sm:$0xff]
  %v237 = vld [vmem:[%s1 + $0x6f0] sm:$0xff]
  %v238 = vld [vmem:[%s1 + $0x6f8] sm:$0xff]
  %v239 = vld [vmem:[%s1 + $0x700] sm:$0xff]
  %v240 = vld [vmem:[%s1 + $0x708] sm:$0xff]
  %v241 = vld [vmem:[%s1 + $0x710] sm:$0xff]
  %v242 = vld [vmem:[%s1 + $0x718] sm:$0xff]
  %v243 = vld [vmem:[%s1 + $0x720] sm:$0xff]
  %v244 = vld [vmem:[%s1 + $0x728] sm:$0xff]
  %v245 = vld [vmem:[%s1 + $0x730] sm:$0xff]
  %v246 = vld [vmem:[%s1 + $0x738] sm:$0xff]
  %v247 = vld [vmem:[%s1 + $0x740] sm:$0xff]
  %v248 = vld [vmem:[%s1 + $0x748] sm:$0xff]
  %v249 = vld [vmem:[%s1 + $0x750] sm:$0xff]
  %v250 = vld [vmem:[%s1 + $0x758] sm:$0xff]
  %v251 = vld [vmem:[%s1 + $0x760] sm:$0xff]
  %v252 = vld [vmem:[%s1 + $0x768] sm:$0xff]
  %v253 = vld [vmem:[%s1 + $0x770] sm:$0xff]
  %v254 = vld [vmem:[%s1 + $0x778] sm:$0xff]
  %v255 = vld [vmem:[%s1 + $0x780] sm:$0xff]
  %v256 = vld [vmem:[%s1 + $0x788] sm:$0xff]
  %v257 = vld [vmem:[%s1 + $0x790] sm:$0xff]
  %v258 = vld [vmem:[%s1 + $0x798] sm:$0xff]
  %v259 = vld [vmem:[%s1 + $0x7a0] sm:$0xff]
  %v260 = vld [vmem:[%s1 + $0x7a8] sm:$0xff]
  %v261 = vld [vmem:[%s1 + $0x7b0] sm:$0xff]
  %v262 = vld [vmem:[%s1 + $0x7b8] sm:$0xff]
  %v263 = vld [vmem:[%s1 + $0x7c0] sm:$0xff]
  %v264 = vld [vmem:[%s1 + $0x7c8] sm:$0xff]
  %v265 = vld [vmem:[%s1 + $0x7d0] sm:$0xff]
  %v266 = vld [vmem:[%s1 + $0x7d8] sm:$0xff]
  %v267 = vld [vmem:[%s1 + $0x7e0] sm:$0xff]
  %v268 = vld [vmem:[%s1 + $0x7e8] sm:$0xff]
  %v269 = vld [vmem:[%s1 + $0x7f0] sm:$0xff]
  %v270 = vld [vmem:[%s1 + $0x7f8] sm:$0xff]
  %271 = vmatprep.subr.mxu0 %v76
  %272 = vmatpush1.msra.mxu0 %v75
  %273 = vmatprep.subr.mxu0 %v72
  %274 = vmatpush1.msra.mxu0 %v71
  %275 = vmatprep.subr.mxu0 %v68
  %276 = vmatpush1.msra.mxu0 %v67
  %277 = vmatprep.subr.mxu0 %v64
  %278 = vmatpush1.msra.mxu0 %v63
  %279 = vmatprep.subr.mxu0 %v60
  %280 = vmatpush1.msra.mxu0 %v59
  %281 = vmatprep.subr.mxu0 %v56
  %282 = vmatpush1.msra.mxu0 %v55
  %283 = vmatprep.subr.mxu0 %v52
  %284 = vmatpush1.msra.mxu0 %v51
  %285 = vmatprep.subr.mxu0 %v48
  %286 = vmatpush1.msra.mxu0 %v47
  %287 = vmatprep.subr.mxu0 %v44
  %288 = vmatpush1.msra.mxu0 %v43
  %289 = vmatprep.subr.mxu0 %v40
  %290 = vmatpush1.msra.mxu0 %v39
  %291 = vmatprep.subr.mxu0 %v36
  %292 = vmatpush1.msra.mxu0 %v35
  %293 = vmatprep.subr.mxu0 %v32
  %294 = vmatpush1.msra.mxu0 %v31
  %295 = vmatprep.subr.mxu0 %v28
  %296 = vmatpush1.msra.mxu0 %v27
  %297 = vmatprep.subr.mxu0 %v24
  %298 = vmatpush1.msra.mxu0 %v23
  %299 = vmatprep.subr.mxu0 %v20
  %300 = vmatpush1.msra.mxu0 %v19
  %301 = vmatprep.subr.mxu0 %v16
  %302 = vmatpush1.msra.mxu0 %v15
  %303 = vmatprep.subr.mxu0 %v140
  %304 = vmatpush2.msra.mxu0 %v139
  %305 = vmatprep.subr.mxu0 %v136
  %306 = vmatpush2.msra.mxu0 %v135
  %307 = vmatprep.subr.mxu0 %v132
  %308 = vmatpush2.msra.mxu0 %v131
  %309 = vmatprep.subr.mxu0 %v128
  %310 = vmatpush2.msra.mxu0 %v127
  %311 = vmatprep.subr.mxu0 %v124
  %312 = vmatpush2.msra.mxu0 %v123
  %313 = vmatprep.subr.mxu0 %v120
  %314 = vmatpush2.msra.mxu0 %v119
  %315 = vmatprep.subr.mxu0 %v116
  %316 = vmatpush2.msra.mxu0 %v115
  %317 = vmatprep.subr.mxu0 %v112
  %318 = vmatpush2.msra.mxu0 %v111
  %319 = vmatprep.subr.mxu0 %v108
  %320 = vmatpush2.msra.mxu0 %v107
  %321 = vmatprep.subr.mxu0 %v104
  %322 = vmatpush2.msra.mxu0 %v103
  %323 = vmatprep.subr.mxu0 %v100
  %324 = vmatpush2.msra.mxu0 %v99
  %325 = vmatprep.subr.mxu0 %v96
  %326 = vmatpush2.msra.mxu0 %v95
  %327 = vmatprep.subr.mxu0 %v92
  %328 = vmatpush2.msra.mxu0 %v91
  %329 = vmatprep.subr.mxu0 %v88
  %330 = vmatpush2.msra.mxu0 %v87
  %331 = vmatprep.subr.mxu0 %v84
  %332 = vmatpush2.msra.mxu0 %v83
  %333 = vmatprep.subr.mxu0 %v80
  %334 = vmatpush2.msra.mxu0 %v79
  %335 = vmatprep.mubr.f32.mxu0 %v12
  %336 = vmatmul.mubr.f32.gmra.mxu0 %v11
  %v337 = vpop.f32.mrf.mxu0
  %v338 = vadd.f32 0.0, %v337
  %v339 = vpop.f32.mrf.mxu0
  %v340 = vadd.f32 0.0, %v339
  %341 = vdwg.mxu0
  %342 = vmatprep.subr.mxu0 %v204
  %343 = vmatpush1.msra.mxu0 %v203
  %344 = vmatprep.subr.mxu0 %v200
  %345 = vmatpush1.msra.mxu0 %v199
  %346 = vmatprep.subr.mxu0 %v196
  %347 = vmatpush1.msra.mxu0 %v195
  %348 = vmatprep.subr.mxu0 %v192
  %349 = vmatpush1.msra.mxu0 %v191
  %350 = vmatprep.subr.mxu0 %v188
  %351 = vmatpush1.msra.mxu0 %v187
  %352 = vmatprep.subr.mxu0 %v184
  %353 = vmatpush1.msra.mxu0 %v183
  %354 = vmatprep.subr.mxu0 %v180
  %355 = vmatpush1.msra.mxu0 %v179
  %356 = vmatprep.subr.mxu0 %v176
  %357 = vmatpush1.msra.mxu0 %v175
  %358 = vmatprep.subr.mxu0 %v172
  %359 = vmatpush1.msra.mxu0 %v171
  %360 = vmatprep.subr.mxu0 %v168
  %361 = vmatpush1.msra.mxu0 %v167
  %362 = vmatprep.subr.mxu0 %v164
  %363 = vmatpush1.msra.mxu0 %v163
  %364 = vmatprep.subr.mxu0 %v160
  %365 = vmatpush1.msra.mxu0 %v159
  %366 = vmatprep.subr.mxu0 %v156
  %367 = vmatpush1.msra.mxu0 %v155
  %368 = vmatprep.subr.mxu0 %v152
  %369 = vmatpush1.msra.mxu0 %v151
  %370 = vmatprep.subr.mxu0 %v148
  %371 = vmatpush1.msra.mxu0 %v147
  %372 = vmatprep.subr.mxu0 %v144
  %373 = vmatpush1.msra.mxu0 %v143
  %374 = vmatprep.subr.mxu0 %v268
  %375 = vmatpush2.msra.mxu0 %v267
  %376 = vmatprep.subr.mxu0 %v264
  %377 = vmatpush2.msra.mxu0 %v263
  %378 = vmatprep.subr.mxu0 %v260
  %379 = vmatpush2.msra.mxu0 %v259
  %380 = vmatprep.subr.mxu0 %v256
  %381 = vmatpush2.msra.mxu0 %v255
  %382 = vmatprep.subr.mxu0 %v252
  %383 = vmatpush2.msra.mxu0 %v251
  %384 = vmatprep.subr.mxu0 %v248
  %385 = vmatpush2.msra.mxu0 %v247
  %386 = vmatprep.subr.mxu0 %v244
  %387 = vmatpush2.msra.mxu0 %v243
  %388 = vmatprep.subr.mxu0 %v240
  %389 = vmatpush2.msra.mxu0 %v239
  %390 = vmatprep.subr.mxu0 %v236
  %391 = vmatpush2.msra.mxu0 %v235
  %392 = vmatprep.subr.mxu0 %v232
  %393 = vmatpush2.msra.mxu0 %v231
  %394 = vmatprep.subr.mxu0 %v228
  %395 = vmatpush2.msra.mxu0 %v227
  %396 = vmatprep.subr.mxu0 %v224
  %397 = vmatpush2.msra.mxu0 %v223
  %398 = vmatprep.subr.mxu0 %v220
  %399 = vmatpush2.msra.mxu0 %v219
  %400 = vmatprep.subr.mxu0 %v216
  %401 = vmatpush2.msra.mxu0 %v215
  %402 = vmatprep.subr.mxu0 %v212
  %403 = vmatpush2.msra.mxu0 %v211
  %404 = vmatprep.subr.mxu0 %v208
  %405 = vmatpush2.msra.mxu0 %v207
  %406 = vmatprep.mubr.f32.mxu0 %v14
  %407 = vmatmul.mubr.f32.gmra.mxu0 %v13
  %v408 = vpop.f32.mrf.mxu0
  %v409 = vadd.f32 %v338, %v408
  %v410 = vpop.f32.mrf.mxu0
  %v411 = vadd.f32 %v340, %v410
  %412 = vdwg.mxu0
  %413 = vmatprep.subr.mxu0 %v78
  %414 = vmatpush1.msra.mxu0 %v77
  %415 = vmatprep.subr.mxu0 %v74
  %416 = vmatpush1.msra.mxu0 %v73
  %417 = vmatprep.subr.mxu0 %v70
  %418 = vmatpush1.msra.mxu0 %v69
  %419 = vmatprep.subr.mxu0 %v66
  %420 = vmatpush1.msra.mxu0 %v65
  %421 = vmatprep.subr.mxu0 %v62
  %422 = vmatpush1.msra.mxu0 %v61
  %423 = vmatprep.subr.mxu0 %v58
  %424 = vmatpush1.msra.mxu0 %v57
  %425 = vmatprep.subr.mxu0 %v54
  %426 = vmatpush1.msra.mxu0 %v53
  %427 = vmatprep.subr.mxu0 %v50
  %428 = vmatpush1.msra.mxu0 %v49
  %429 = vmatprep.subr.mxu0 %v46
  %430 = vmatpush1.msra.mxu0 %v45
  %431 = vmatprep.subr.mxu0 %v42
  %432 = vmatpush1.msra.mxu0 %v41
  %433 = vmatprep.subr.mxu0 %v38
  %434 = vmatpush1.msra.mxu0 %v37
  %435 = vmatprep.subr.mxu0 %v34
  %436 = vmatpush1.msra.mxu0 %v33
  %437 = vmatprep.subr.mxu0 %v30
  %438 = vmatpush1.msra.mxu0 %v29
  %439 = vmatprep.subr.mxu0 %v26
  %440 = vmatpush1.msra.mxu0 %v25
  %441 = vmatprep.subr.mxu0 %v22
  %442 = vmatpush1.msra.mxu0 %v21
  %443 = vmatprep.subr.mxu0 %v18
  %444 = vmatpush1.msra.mxu0 %v17
  %445 = vmatprep.subr.mxu0 %v142
  %446 = vmatpush2.msra.mxu0 %v141
  %447 = vmatprep.subr.mxu0 %v138
  %448 = vmatpush2.msra.mxu0 %v137
  %449 = vmatprep.subr.mxu0 %v134
  %450 = vmatpush2.msra.mxu0 %v133
  %451 = vmatprep.subr.mxu0 %v130
  %452 = vmatpush2.msra.mxu0 %v129
  %453 = vmatprep.subr.mxu0 %v126
  %454 = vmatpush2.msra.mxu0 %v125
  %455 = vmatprep.subr.mxu0 %v122
  %456 = vmatpush2.msra.mxu0 %v121
  %457 = vmatprep.subr.mxu0 %v118
  %458 = vmatpush2.msra.mxu0 %v117
  %459 = vmatprep.subr.mxu0 %v114
  %460 = vmatpush2.msra.mxu0 %v113
  %461 = vmatprep.subr.mxu0 %v110
  %462 = vmatpush2.msra.mxu0 %v109
  %463 = vmatprep.subr.mxu0 %v106
  %464 = vmatpush2.msra.mxu0 %v105
  %465 = vmatprep.subr.mxu0 %v102
  %466 = vmatpush2.msra.mxu0 %v101
  %467 = vmatprep.subr.mxu0 %v98
  %468 = vmatpush2.msra.mxu0 %v97
  %469 = vmatprep.subr.mxu0 %v94
  %470 = vmatpush2.msra.mxu0 %v93
  %471 = vmatprep.subr.mxu0 %v90
  %472 = vmatpush2.msra.mxu0 %v89
  %473 = vmatprep.subr.mxu0 %v86
  %474 = vmatpush2.msra.mxu0 %v85
  %475 = vmatprep.subr.mxu0 %v82
  %476 = vmatpush2.msra.mxu0 %v81
  %477 = vmatprep.mubr.f32.mxu0 %v12
  %478 = vmatmul.mubr.f32.gmra.mxu0 %v11
  %v479 = vpop.f32.mrf.mxu0
  %v480 = vadd.f32 0.0, %v479
  %v481 = vpop.f32.mrf.mxu0
  %v482 = vadd.f32 0.0, %v481
  %483 = vdwg.mxu0
  %484 = vmatprep.subr.mxu0 %v206
  %485 = vmatpush1.msra.mxu0 %v205
  %486 = vmatprep.subr.mxu0 %v202
  %487 = vmatpush1.msra.mxu0 %v201
  %488 = vmatprep.subr.mxu0 %v198
  %489 = vmatpush1.msra.mxu0 %v197
  %490 = vmatprep.subr.mxu0 %v194
  %491 = vmatpush1.msra.mxu0 %v193
  %492 = vmatprep.subr.mxu0 %v190
  %493 = vmatpush1.msra.mxu0 %v189
  %494 = vmatprep.subr.mxu0 %v186
  %495 = vmatpush1.msra.mxu0 %v185
  %496 = vmatprep.subr.mxu0 %v182
  %497 = vmatpush1.msra.mxu0 %v181
  %498 = vmatprep.subr.mxu0 %v178
  %499 = vmatpush1.msra.mxu0 %v177
  %500 = vmatprep.subr.mxu0 %v174
  %501 = vmatpush1.msra.mxu0 %v173
  %502 = vmatprep.subr.mxu0 %v170
  %503 = vmatpush1.msra.mxu0 %v169
  %504 = vmatprep.subr.mxu0 %v166
  %505 = vmatpush1.msra.mxu0 %v165
  %506 = vmatprep.subr.mxu0 %v162
  %507 = vmatpush1.msra.mxu0 %v161
  %508 = vmatprep.subr.mxu0 %v158
  %509 = vmatpush1.msra.mxu0 %v157
  %510 = vmatprep.subr.mxu0 %v154
  %511 = vmatpush1.msra.mxu0 %v153
  %512 = vmatprep.subr.mxu0 %v150
  %513 = vmatpush1.msra.mxu0 %v149
  %514 = vmatprep.subr.mxu0 %v146
  %515 = vmatpush1.msra.mxu0 %v145
  %516 = vmatprep.subr.mxu0 %v270
  %517 = vmatpush2.msra.mxu0 %v269
  %518 = vmatprep.subr.mxu0 %v266
  %519 = vmatpush2.msra.mxu0 %v265
  %520 = vmatprep.subr.mxu0 %v262
  %521 = vmatpush2.msra.mxu0 %v261
  %522 = vmatprep.subr.mxu0 %v258
  %523 = vmatpush2.msra.mxu0 %v257
  %524 = vmatprep.subr.mxu0 %v254
  %525 = vmatpush2.msra.mxu0 %v253
  %526 = vmatprep.subr.mxu0 %v250
  %527 = vmatpush2.msra.mxu0 %v249
  %528 = vmatprep.subr.mxu0 %v246
  %529 = vmatpush2.msra.mxu0 %v245
  %530 = vmatprep.subr.mxu0 %v242
  %531 = vmatpush2.msra.mxu0 %v241
  %532 = vmatprep.subr.mxu0 %v238
  %533 = vmatpush2.msra.mxu0 %v237
  %534 = vmatprep.subr.mxu0 %v234
  %535 = vmatpush2.msra.mxu0 %v233
  %536 = vmatprep.subr.mxu0 %v230
  %537 = vmatpush2.msra.mxu0 %v229
  %538 = vmatprep.subr.mxu0 %v226
  %539 = vmatpush2.msra.mxu0 %v225
  %540 = vmatprep.subr.mxu0 %v222
  %541 = vmatpush2.msra.mxu0 %v221
  %542 = vmatprep.subr.mxu0 %v218
  %543 = vmatpush2.msra.mxu0 %v217
  %544 = vmatprep.subr.mxu0 %v214
  %545 = vmatpush2.msra.mxu0 %v213
  %546 = vmatprep.subr.mxu0 %v210
  %547 = vmatpush2.msra.mxu0 %v209
  %548 = vmatprep.mubr.f32.mxu0 %v14
  %549 = vmatmul.mubr.f32.gmra.mxu0 %v13
  %v550 = vpop.f32.mrf.mxu0
  %v551 = vadd.f32 %v480, %v550
  %v552 = vpop.f32.mrf.mxu0
  %v553 = vadd.f32 %v482, %v552
  %554 = vdwg.mxu0
  %555 = vst [vmem:[%s2] sm:$0xff] %v409
  %556 = vst [vmem:[%s2 + $0x8] sm:$0xff] %v411
  %557 = vst [vmem:[%s2 + $0x10] sm:$0xff] %v551
  %558 = vst [vmem:[%s2 + $0x18] sm:$0xff] %v553
  // Predicated region
  $region10: #{fft_module.1} parent=0 // pred_check
    _
  $region11: #{fft_module.1} parent=0 // pred_check_branch
    %560 = sbr.rel (0) target = $region13
  $region12: #{fft_module.1} parent=0 // pred_region
    _
  $region13: #{fft_module.1} parent=0 // pred_fallthru
    _
  // Predicated region
  $region14: #{fft_module.1} parent=0 // pred_check
    _
  $region15: #{fft_module.1} parent=0 // pred_check_branch
    %562 = sbr.rel (0) target = $region17
  $region16: #{fft_module.1} parent=0 // pred_region
    _
  $region17: #{fft_module.1} parent=0 // pred_fallthru
    _

</llo_original>
